<compile_context>
chip_gen: v6e
topology: v6e:2x2x1
jax: 0.10.0
libtpu: 0.0.40
codegen_flags: <defaults>
</compile_context>

<pallas_src>
import functools

import jax
import jax.numpy as jnp
from jax import lax
from jax.experimental import pallas as pl
from jax.experimental.pallas import tpu as pltpu

LANES = 128
SUBLANES = 8
DEFAULT_TILE_ROWS = 4096   # 4096x128 f32 = 2 MiB/block; 2 inputs x 2 bufs = 8 MiB
N_CORES = 2                # v7x has 2 TCs; extra axis is a serial no-op on v5e/v6e
CHUNK_UNROLL = 4


def _cdiv(a, b):
    return -(-a // b)


def _pow_static(x, gamma):
    """x**gamma with gamma a static Python number; integer -> VPU multiplies."""
    g = float(gamma)
    if g.is_integer() and 0.0 <= g <= 16.0:
        gi = int(g)
        if gi == 0:
            return jnp.ones_like(x)
        out = x
        for _ in range(gi - 1):
            out = out * x
        return out
    return jnp.power(x, jnp.float32(g))  # non-integer gamma: EUP exp/log


def _focal_elementwise(p, t, alpha, gamma):
    """Per-element focal loss; target compared in its native dtype."""
    p = p.astype(jnp.float32)
    if t.dtype == jnp.bool_:
        is_pos = t
    elif jnp.issubdtype(t.dtype, jnp.floating):
        is_pos = t > jnp.asarray(0.5, t.dtype)
    else:
        is_pos = t > jnp.asarray(0, t.dtype)
    # probs = (cat(1-p, p) * one_hot(target)).sum(1)
    probs = jnp.where(is_pos, p, 1.0 - p)
    probs = jnp.clip(probs, 0.0001, 1.0)
    # fold the leading negation into the alpha select (one fewer VPU op)
    coef = jnp.where(is_pos, jnp.float32(-alpha), jnp.float32(alpha - 1.0))
    return coef * _pow_static(1.0 - probs, gamma) * jnp.log(probs)


def _focal_kernel(pred_ref, tgt_ref, out_ref, *, alpha, gamma,
                  tiles_per_core, n_full_tiles, full_chunks, ragged_chunks,
                  unroll):
    c = pl.program_id(0)               # core-split axis ("parallel")
    i = pl.program_id(1)               # reduction axis   ("arbitrary")
    tile_idx = c * tiles_per_core + i  # logical tile index

    @pl.when(i == 0)
    def _():
        out_ref[...] = jnp.zeros_like(out_ref)

    def accumulate(n_chunks):
        # 8-row chunks: every intermediate is a single vreg; the f32
        # accumulator is carried in registers and written to VMEM once.
        def body(ci, acc):
            off = pl.multiple_of(ci * SUBLANES, SUBLANES)
            p = pred_ref[pl.ds(off, SUBLANES), :]
            t = tgt_ref[pl.ds(off, SUBLANES), :]
            return acc + _focal_elementwise(p, t, alpha, gamma)
        return lax.fori_loop(0, n_chunks, body,
                             jnp.zeros((SUBLANES, LANES), jnp.float32),
                             unroll=max(1, min(unroll, n_chunks)))

    # Fully valid tiles: static chunk count, no masking anywhere.
    @pl.when(tile_idx < n_full_tiles)
    def _():
        out_ref[...] += accumulate(full_chunks)

    # Ragged last tile: only loop over its valid 8-row chunks (still static).
    if ragged_chunks > 0:
        @pl.when(tile_idx == n_full_tiles)
        def _():
            out_ref[...] += accumulate(ragged_chunks)
    # tile_idx > last real tile (core-split round-up): contributes nothing.


def focal_loss(pred, target, *, alpha=0.25, gamma=2, size_average=False,
               tile_rows=DEFAULT_TILE_ROWS):
    """Pallas FocalLoss. pred/target: same shape, any rank. Returns scalar f32.

    target may be float / int / bool; narrower target dtypes (int8/bool) reduce
    HBM traffic on this bandwidth-bound kernel.
    """
    pred_flat = pred.reshape(-1)
    tgt_flat = target.reshape(-1)
    n = pred_flat.shape[0]

    # Kernel covers whole (8 x 128)-element blocks; everything else (< 1024
    # elements) goes to a tiny jnp epilogue. No full-array pad copy.
    rows = (n // (SUBLANES * LANES)) * SUBLANES
    n_main = rows * LANES

    loss = jnp.zeros((), jnp.float32)

    if rows > 0:
        pred2d = pred_flat[:n_main].reshape(rows, LANES)
        tgt2d = tgt_flat[:n_main].reshape(rows, LANES)

        # Tile rows: multiple of 8, capped at the array extent.
        tile = max(SUBLANES, (min(int(tile_rows), rows) // SUBLANES) * SUBLANES)
        n_tiles = _cdiv(rows, tile)
        n_full_tiles = rows // tile
        ragged_chunks = (rows % tile) // SUBLANES
        full_chunks = tile // SUBLANES

        cores = max(1, min(N_CORES, n_tiles))
        tiles_per_core = _cdiv(n_tiles, cores)

        kernel = functools.partial(
            _focal_kernel, alpha=float(alpha), gamma=gamma,
            tiles_per_core=tiles_per_core, n_full_tiles=n_full_tiles,
            full_chunks=full_chunks, ragged_chunks=ragged_chunks,
            unroll=CHUNK_UNROLL)

        def in_map(c, i):
            # Clamp the round-up tile of the last core back in range; that
            # (single, at most) duplicate tile is skipped by the pl.when gates.
            return (jnp.minimum(c * tiles_per_core + i, n_tiles - 1), 0)

        in_bytes = (pred2d.size * pred2d.dtype.itemsize
                    + tgt2d.size * tgt2d.dtype.itemsize)
        cost = pl.CostEstimate(
            flops=10 * n_main, transcendentals=n_main,
            bytes_accessed=in_bytes + cores * SUBLANES * LANES * 4)

        partials = pl.pallas_call(
            kernel,
            out_shape=jax.ShapeDtypeStruct((cores * SUBLANES, LANES),
                                           jnp.float32),
            grid=(cores, tiles_per_core),
            in_specs=[
                pl.BlockSpec((tile, LANES), in_map),
                pl.BlockSpec((tile, LANES), in_map),
            ],
            # One lane-resident (8,128) accumulator block per core; resident
            # across the reduction axis, written back once per core.
            out_specs=pl.BlockSpec((SUBLANES, LANES), lambda c, i: (c, 0)),
            compiler_params=pltpu.CompilerParams(
                dimension_semantics=("parallel", "arbitrary")),
            cost_estimate=cost,
        )(pred2d, tgt2d)

        loss = loss + jnp.sum(partials)   # single cross-lane reduce

    if n_main < n:
        # Ragged remainder (< 1024 elements): plain jnp epilogue.
        loss = loss + jnp.sum(_focal_elementwise(
            pred_flat[n_main:], tgt_flat[n_main:], float(alpha), gamma))

    if size_average:
        loss = loss / jnp.float32(n)
    return loss


def focal_loss_ref(pred, target, *, alpha=0.25, gamma=2, size_average=False):
    """Pure-JAX reference matching the PyTorch module."""
    p = pred.reshape(-1).astype(jnp.float32)
    t = target.reshape(-1).astype(jnp.float32)
    probs = jnp.where(t > 0.5, p, 1.0 - p)
    probs = jnp.clip(probs, 0.0001, 1.0)
    alpha_t = jnp.where(t > 0.5, alpha, 1.0 - alpha)
    batch_loss = -alpha_t * jnp.power(1.0 - probs, gamma) * jnp.log(probs)
    return batch_loss.mean() if size_average else batch_loss.sum()


if __name__ == "__main__":
    key = jax.random.PRNGKey(0)
    k1, k2, k3, k4, k5, k6 = jax.random.split(key, 6)

    # Test 1: lane-aligned NCHW input, float targets, sum reduction, default tile.
    shape1 = (2, 4, 16, 16)
    pred1 = jax.nn.sigmoid(jax.random.normal(k1, shape1, dtype=jnp.float32))
    tgt1 = jax.random.bernoulli(k2, p=0.3, shape=shape1).astype(jnp.float32)
    out1 = jax.block_until_ready(focal_loss(pred1, tgt1, alpha=0.25, gamma=2))
    ref1 = focal_loss_ref(pred1, tgt1, alpha=0.25, gamma=2)
    assert jnp.allclose(out1, ref1, rtol=1e-5, atol=1e-5), (out1, ref1)

    # Test 2: ragged element count (1155) -> jnp tail epilogue, mean reduction.
    shape2 = (3, 5, 7, 11)
    pred2 = jax.nn.sigmoid(jax.random.normal(k3, shape2, dtype=jnp.float32))
    tgt2 = jax.random.bernoulli(k4, p=0.5, shape=shape2).astype(jnp.float32)
    out2 = jax.block_until_ready(
        focal_loss(pred2, tgt2, size_average=True, tile_rows=8))
    ref2 = focal_loss_ref(pred2, tgt2, size_average=True)
    assert jnp.allclose(out2, ref2, rtol=1e-5, atol=1e-5), (out2, ref2)

    # Test 3: multi-tile grid, ragged last tile, 2-core split, int32 targets,
    # ragged element tail (24000 = 23 * 1024 + 448).
    shape3 = (5, 3, 40, 40)
    pred3 = jax.nn.sigmoid(jax.random.normal(k5, shape3, dtype=jnp.float32))
    tgt3 = jax.random.bernoulli(k6, p=0.4, shape=shape3).astype(jnp.int32)
    out3 = jax.block_until_ready(focal_loss(pred3, tgt3, tile_rows=64))
    ref3 = focal_loss_ref(pred3, tgt3)
    assert jnp.allclose(out3, ref3, rtol=1e-5, atol=1e-5), (out3, ref3)

    print("KERNEL_OK")
</pallas_src>

<mosaic_0001>
module attributes {stable_mosaic.version = 11 : i64} {
  func.func @_focal_kernel(%arg0: i32, %arg1: i32, %arg2: memref<16x128xf32, #tpu.memory_space<vmem>>, %arg3: memref<16x128xf32, #tpu.memory_space<vmem>>, %arg4: memref<8x128xf32, #tpu.memory_space<vmem>>) attributes {dimension_semantics = [#tpu.dimension_semantics<parallel>, #tpu.dimension_semantics<arbitrary>], iteration_bounds = array<i64: 1, 1>, scalar_prefetch = 0 : i64, scratch_operands = 0 : i64, tpu.core_type = #tpu.core_type<tc>, window_params = [{transform_indices = @transform_0, window_bounds = array<i64: 16, 128>}, {transform_indices = @transform_1, window_bounds = array<i64: 16, 128>}, {transform_indices = @transform_2, window_bounds = array<i64: 8, 128>}]} {
    %c1_i32 = arith.constant 1 : i32
    %0 = arith.muli %arg0, %c1_i32 : i32
    %1 = arith.addi %0, %arg1 : i32
    %c0_i32 = arith.constant 0 : i32
    %2 = arith.cmpi eq, %arg1, %c0_i32 : i32
    %3 = arith.extui %2 : i1 to i32
    %c0_i32_0 = arith.constant 0 : i32
    %4 = arith.cmpi ne, %3, %c0_i32_0 : i32
    scf.if %4 {
      %cst = arith.constant 0.000000e+00 : f32
      %8 = vector.broadcast %cst : f32 to vector<8x128xf32>
      %c0 = arith.constant 0 : index
      %c0_3 = arith.constant 0 : index
      %9 = vector.load %arg4[%c0, %c0_3] : memref<8x128xf32, #tpu.memory_space<vmem>>, vector<8x128xf32>
      tpu.vector_store %arg4[%c0, %c0_3], %8 {strides = array<i32>} : memref<8x128xf32, #tpu.memory_space<vmem>>, vector<8x128xf32>,
    } else {
    }
    %c1_i32_1 = arith.constant 1 : i32
    %5 = arith.cmpi slt, %1, %c1_i32_1 : i32
    %6 = arith.extui %5 : i1 to i32
    %c0_i32_2 = arith.constant 0 : i32
    %7 = arith.cmpi ne, %6, %c0_i32_2 : i32
    scf.if %7 {
      %c0 = arith.constant 0 : index
      %c0_3 = arith.constant 0 : index
      %8 = vector.load %arg4[%c0, %c0_3] : memref<8x128xf32, #tpu.memory_space<vmem>>, vector<8x128xf32>
      %cst = arith.constant 0.000000e+00 : f32
      %9 = vector.broadcast %cst : f32 to vector<8x128xf32>
      %c0_i32_4 = arith.constant 0 : i32
      %c8_i32 = arith.constant 8 : i32
      %10 = arith.muli %c0_i32_4, %c8_i32 : i32
      %11 = tpu.assume_multiple %10, 8 : i32
      %12 = arith.index_cast %11 : i32 to index
      %c0_5 = arith.constant 0 : index
      %13 = vector.load %arg2[%12, %c0_5] : memref<16x128xf32, #tpu.memory_space<vmem>>, vector<8x128xf32>
      %14 = arith.index_cast %11 : i32 to index
      %c0_6 = arith.constant 0 : index
      %15 = vector.load %arg3[%14, %c0_6] : memref<16x128xf32, #tpu.memory_space<vmem>>, vector<8x128xf32>
      %cst_7 = arith.constant 5.000000e-01 : f32
      %16 = vector.broadcast %cst_7 : f32 to vector<8x128xf32>
      %17 = arith.cmpf ogt, %15, %16 : vector<8x128xf32>
      %cst_8 = arith.constant 1.000000e+00 : f32
      %18 = vector.broadcast %cst_8 : f32 to vector<8x128xf32>
      %19 = arith.subf %18, %13 : vector<8x128xf32>
      %20 = arith.select %17, %13, %19 : vector<8x128xi1>, vector<8x128xf32>
      %cst_9 = arith.constant 9.99999974E-5 : f32
      %cst_10 = arith.constant 1.000000e+00 : f32
      %21 = vector.broadcast %cst_9 : f32 to vector<8x128xf32>
      %22 = arith.maximumf %21, %20 : vector<8x128xf32>
      %23 = vector.broadcast %cst_10 : f32 to vector<8x128xf32>
      %24 = arith.minimumf %23, %22 : vector<8x128xf32>
      %cst_11 = arith.constant -2.500000e-01 : f32
      %cst_12 = arith.constant -7.500000e-01 : f32
      %25 = vector.broadcast %cst_11 : f32 to vector<8x128xf32>
      %26 = vector.broadcast %cst_12 : f32 to vector<8x128xf32>
      %27 = arith.select %17, %25, %26 : vector<8x128xi1>, vector<8x128xf32>
      %cst_13 = arith.constant 1.000000e+00 : f32
      %28 = vector.broadcast %cst_13 : f32 to vector<8x128xf32>
      %29 = arith.subf %28, %24 : vector<8x128xf32>
      %30 = arith.mulf %29, %29 : vector<8x128xf32>
      %31 = arith.mulf %27, %30 : vector<8x128xf32>
      %32 = math.log %24 : vector<8x128xf32>
      %33 = arith.mulf %31, %32 : vector<8x128xf32>
      %34 = arith.addf %9, %33 : vector<8x128xf32>
      %c1_i32_14 = arith.constant 1 : i32
      %c8_i32_15 = arith.constant 8 : i32
      %35 = arith.muli %c1_i32_14, %c8_i32_15 : i32
      %36 = tpu.assume_multiple %35, 8 : i32
      %37 = arith.index_cast %36 : i32 to index
      %c0_16 = arith.constant 0 : index
      %38 = vector.load %arg2[%37, %c0_16] : memref<16x128xf32, #tpu.memory_space<vmem>>, vector<8x128xf32>
      %39 = arith.index_cast %36 : i32 to index
      %c0_17 = arith.constant 0 : index
      %40 = vector.load %arg3[%39, %c0_17] : memref<16x128xf32, #tpu.memory_space<vmem>>, vector<8x128xf32>
      %cst_18 = arith.constant 5.000000e-01 : f32
      %41 = vector.broadcast %cst_18 : f32 to vector<8x128xf32>
      %42 = arith.cmpf ogt, %40, %41 : vector<8x128xf32>
      %cst_19 = arith.constant 1.000000e+00 : f32
      %43 = vector.broadcast %cst_19 : f32 to vector<8x128xf32>
      %44 = arith.subf %43, %38 : vector<8x128xf32>
      %45 = arith.select %42, %38, %44 : vector<8x128xi1>, vector<8x128xf32>
      %cst_20 = arith.constant 9.99999974E-5 : f32
      %cst_21 = arith.constant 1.000000e+00 : f32
      %46 = vector.broadcast %cst_20 : f32 to vector<8x128xf32>
      %47 = arith.maximumf %46, %45 : vector<8x128xf32>
      %48 = vector.broadcast %cst_21 : f32 to vector<8x128xf32>
      %49 = arith.minimumf %48, %47 : vector<8x128xf32>
      %cst_22 = arith.constant -2.500000e-01 : f32
      %cst_23 = arith.constant -7.500000e-01 : f32
      %50 = vector.broadcast %cst_22 : f32 to vector<8x128xf32>
      %51 = vector.broadcast %cst_23 : f32 to vector<8x128xf32>
      %52 = arith.select %42, %50, %51 : vector<8x128xi1>, vector<8x128xf32>
      %cst_24 = arith.constant 1.000000e+00 : f32
      %53 = vector.broadcast %cst_24 : f32 to vector<8x128xf32>
      %54 = arith.subf %53, %49 : vector<8x128xf32>
      %55 = arith.mulf %54, %54 : vector<8x128xf32>
      %56 = arith.mulf %52, %55 : vector<8x128xf32>
      %57 = math.log %49 : vector<8x128xf32>
      %58 = arith.mulf %56, %57 : vector<8x128xf32>
      %59 = arith.addf %34, %58 : vector<8x128xf32>
      %c2_i32 = arith.constant 2 : i32
      %60 = arith.addf %8, %59 : vector<8x128xf32>
      %c0_25 = arith.constant 0 : index
      %c0_26 = arith.constant 0 : index
      %61 = vector.load %arg4[%c0_25, %c0_26] : memref<8x128xf32, #tpu.memory_space<vmem>>, vector<8x128xf32>
      tpu.vector_store %arg4[%c0_25, %c0_26], %60 {strides = array<i32>} : memref<8x128xf32, #tpu.memory_space<vmem>>, vector<8x128xf32>,
    } else {
    }
    return
  }
  func.func @transform_0(%arg0: i32, %arg1: i32) -> (i32, i32) {
    %c1_i32 = arith.constant 1 : i32
    %0 = arith.muli %arg0, %c1_i32 : i32
    %1 = arith.addi %0, %arg1 : i32
    %c0_i32 = arith.constant 0 : i32
    %2 = arith.minsi %1, %c0_i32 : i32
    %c0_i32_0 = arith.constant 0 : i32
    %c0_i32_1 = arith.constant 0 : i32
    return %2, %c0_i32_0 : i32, i32
  }
  func.func @transform_1(%arg0: i32, %arg1: i32) -> (i32, i32) {
    %c1_i32 = arith.constant 1 : i32
    %0 = arith.muli %arg0, %c1_i32 : i32
    %1 = arith.addi %0, %arg1 : i32
    %c0_i32 = arith.constant 0 : i32
    %2 = arith.minsi %1, %c0_i32 : i32
    %c0_i32_0 = arith.constant 0 : i32
    %c0_i32_1 = arith.constant 0 : i32
    return %2, %c0_i32_0 : i32, i32
  }
  func.func @transform_2(%arg0: i32, %arg1: i32) -> (i32, i32) {
    %c0_i32 = arith.constant 0 : i32
    %c0_i32_0 = arith.constant 0 : i32
    return %arg0, %c0_i32 : i32, i32
  }
}

</mosaic_0001>

<llo_original>
// kernel: tpu_custom_call.1
$region0: #{tpu_custom_call.1}
  #allocation0 [shape = 'u32[]', space=smem, size = 0x4, offset = 0x4, fixed_abs, tag = 'smem constant byte address 0x4 - core index']
  #allocation1 [shape = 'u32[144,128]{1,0:T(1,128)}', space=vmem, size = 0x12000, scoped, tag = 'internal scratch']
  %s0 = inlined_call_operand.hbm [shape: f32[16,128], index: 0, kind: input, shape index: {}]
  %s1 = inlined_call_operand.hbm [shape: f32[16,128], index: 1, kind: input, shape index: {}]
  %s2 = inlined_call_operand.hbm [shape: f32[8,128], index: 2, kind: output, shape index: {}]
  %s3 = sld [smem:[#allocation0]]
  $region34: #{tpu_custom_call.1} parent=0
    _
  %s5 = ssub.s32 1, %s3
  %s6 = scalar_select 0, %s5, %s3
  $region1: #{tpu_custom_call.1} parent=0
    #allocation2 [shape = 'u8[8192]{0}', space=vmem, size = 0x2000, scoped, tag = 'input window, operand 0, single buffered']
    #allocation3 [shape = 's32[1]{0}', space=sflag, size = 0x4, scoped, tag = 'scoped memory for tpu_custom_call.1']
    #allocation4 [shape = 's32[1]{0}', space=sflag, size = 0x4, scoped, tag = 'scoped memory for tpu_custom_call.1']
    #allocation5 [shape = 'u8[8192]{0}', space=vmem, size = 0x2000, scoped, tag = 'input window, operand 1, single buffered']
    #allocation6 [shape = 's32[1]{0}', space=sflag, size = 0x4, scoped, tag = 'scoped memory for tpu_custom_call.1']
    #allocation7 [shape = 'u8[4096]{0}', space=vmem, size = 0x1000, scoped, tag = 'output window, operand 0, single buffered']
    %7 = vsyncpa [#allocation3], 0
    %8 = vsyncpa [#allocation6], 0
    %9 = vsyncpa [#allocation4], 0
    // Predicated region
    $region2: #{tpu_custom_call.1} parent=1 // pred_check
      _
    $region3: #{tpu_custom_call.1} parent=1 // pred_check_branch
      %11 = sbr.rel (0) target = $region5
    $region4: #{tpu_custom_call.1} parent=1 // pred_region
      %s12 = sadd.s32 0, 0
      %p13 = scmp.lt.s32.totalorder %s12, 0
      %s14 = scalar_select %p13, %s12, 0
      %s15 = smul.u32 2, %s14
      %s17 = ssub.s32 256, 256
      %18 = vsyncadd [#allocation3], %s17
      %s19 = smul.addr %s15, 128
      %s20 = scalar_lea.hbm %s0, %s19
      %s21 = sshll.u32 [#allocation2], 4
      %s22 = int_to_ptr.vmem [resolvable:$true] %s21
      %27 = dma.hbm_to_vmem [thread:$0]  %s20, 256, %s22, [#allocation3], 128, 128, 8
    $region5: #{tpu_custom_call.1} parent=1 // pred_fallthru
      _
    // Predicated region
    $region6: #{tpu_custom_call.1} parent=1 // pred_check
      _
    $region7: #{tpu_custom_call.1} parent=1 // pred_check_branch
      %29 = sbr.rel (0) target = $region9
    $region8: #{tpu_custom_call.1} parent=1 // pred_region
      %s30 = sadd.s32 0, 0
      %p31 = scmp.lt.s32.totalorder %s30, 0
      %s32 = scalar_select %p31, %s30, 0
      %s33 = smul.u32 2, %s32
      %s35 = ssub.s32 256, 256
      %36 = vsyncadd [#allocation6], %s35
      %s37 = smul.addr %s33, 128
      %s38 = scalar_lea.hbm %s1, %s37
      %s39 = sshll.u32 [#allocation5], 4
      %s40 = int_to_ptr.vmem [resolvable:$true] %s39
      %45 = dma.hbm_to_vmem [thread:$0]  %s38, 256, %s40, [#allocation6], 128, 128, 8
    $region9: #{tpu_custom_call.1} parent=1 // pred_fallthru
      _
    // Predicated region
    $region10: #{tpu_custom_call.1} parent=1 // pred_check
      _
    $region11: #{tpu_custom_call.1} parent=1 // pred_check_branch
      %47 = sbr.rel (0) target = $region13
    $region12: #{tpu_custom_call.1} parent=1 // pred_region
      %48 = dma.done [#allocation3], 256
    $region13: #{tpu_custom_call.1} parent=1 // pred_fallthru
      _
    // Predicated region
    $region14: #{tpu_custom_call.1} parent=1 // pred_check
      _
    $region15: #{tpu_custom_call.1} parent=1 // pred_check_branch
      %50 = sbr.rel (0) target = $region17
    $region16: #{tpu_custom_call.1} parent=1 // pred_region
      %51 = dma.done [#allocation6], 256
    $region17: #{tpu_custom_call.1} parent=1 // pred_fallthru
      _
    %s52 = sadd.s32 0, 0
    %p53 = scmp.lt.s32.totalorder %s52, 0
    %s54 = scalar_select %p53, %s52, 0
    %s55 = smul.u32 2, %s54
    %s56 = sadd.s32 0, 0
    %p57 = scmp.lt.s32.totalorder %s56, 0
    %s58 = scalar_select %p57, %s56, 0
    %s59 = smul.u32 2, %s58
    %s60 = sadd.s32 0, 0
    %p61 = scmp.eq.s32.totalorder 0, 0
    // Predicated region
    $region18: #{tpu_custom_call.1} parent=1 // pred_check
      %p62 = pneg %p61
    $region19: #{tpu_custom_call.1} parent=1 // pred_check_branch
      %64 = sbr.rel (%p62) target = $region21
    $region20: #{tpu_custom_call.1} parent=1 // pred_region
      %65 = vst [vmem:[#allocation7] sm:$0xff] 0.0
    $region21: #{tpu_custom_call.1} parent=1 // pred_fallthru
      _
    %p66 = scmp.lt.s32.totalorder %s60, 1
    // Predicated region
    $region22: #{tpu_custom_call.1} parent=1 // pred_check
      %p67 = pneg %p66
    $region23: #{tpu_custom_call.1} parent=1 // pred_check_branch
      %69 = sbr.rel (%p67) target = $region25
    $region24: #{tpu_custom_call.1} parent=1 // pred_region
      %v70 = vld [vmem:[#allocation7] sm:$0xff]
      %v71 = vld [vmem:[#allocation2] sm:$0xff]
      %v72 = vld [vmem:[#allocation5] sm:$0xff]
      %vm73 = vcmp.gt.f32.partialorder %v72, 0.5
      %v74 = vsub.f32 1.0, %v71
      %v75 = vsel %vm73, %v71, %v74
      %v76 = vmax.f32 %v75, 0.0001
      %v77 = vmin.f32 %v76, 1.0
      %v78 = vsel %vm73, -0.25, -0.75
      %v79 = vsub.f32 1.0, %v77
      %v80 = vmul.f32 %v79, %v79
      %v81 = vmul.f32 %v78, %v80
      %v82 = vlog2.pop %v77
      %v83 = vmul.f32 %v82, 0.6931472
      %v84 = vmul.f32 %v81, %v83
      %v85 = vadd.f32 %v84, 0.0
      %s86 = scalar_lea.vmem [#allocation2], 8
      %v87 = vld [vmem:[%s86] sm:$0xff]
      %s88 = scalar_lea.vmem [#allocation5], 8
      %v89 = vld [vmem:[%s88] sm:$0xff]
      %vm90 = vcmp.gt.f32.partialorder %v89, 0.5
      %v91 = vsub.f32 1.0, %v87
      %v92 = vsel %vm90, %v87, %v91
      %v93 = vmax.f32 %v92, 0.0001
      %v94 = vmin.f32 %v93, 1.0
      %v95 = vsel %vm90, -0.25, -0.75
      %v96 = vsub.f32 1.0, %v94
      %v97 = vmul.f32 %v96, %v96
      %v98 = vmul.f32 %v95, %v97
      %v99 = vlog2.pop %v94
      %v100 = vmul.f32 %v99, 0.6931472
      %v101 = vmul.f32 %v98, %v100
      %v102 = vadd.f32 %v85, %v101
      %v103 = vadd.f32 %v70, %v102
      %104 = vst [vmem:[#allocation7] sm:$0xff] %v103
    $region25: #{tpu_custom_call.1} parent=1 // pred_fallthru
      _
    // Predicated region
    $region26: #{tpu_custom_call.1} parent=1 // pred_check
      _
    $region27: #{tpu_custom_call.1} parent=1 // pred_check_branch
      %106 = sbr.rel (0) target = $region29
    $region28: #{tpu_custom_call.1} parent=1 // pred_region
      %s108 = ssub.s32 128, 128
      %109 = vsyncadd [#allocation4], %s108
      %s111 = sshll.u32 [#allocation7], 4
      %s112 = int_to_ptr.vmem [resolvable:$true] %s111
      %114 = dma.vmem_to_hbm [thread:$0]  %s112, 128, %s2, [#allocation4]
    $region29: #{tpu_custom_call.1} parent=1 // pred_fallthru
      _
    // Predicated region
    $region30: #{tpu_custom_call.1} parent=1 // pred_check
      _
    $region31: #{tpu_custom_call.1} parent=1 // pred_check_branch
      %116 = sbr.rel (0) target = $region33
    $region32: #{tpu_custom_call.1} parent=1 // pred_region
      %117 = dma.done [#allocation4], 128
    $region33: #{tpu_custom_call.1} parent=1 // pred_fallthru
      _
    %118 = vsyncpa [#allocation3], 1
    %119 = vsyncpa [#allocation6], 1
    %120 = vsyncpa [#allocation4], 1

</llo_original>
